<compile_context>
chip_gen: v7x
topology: tpu7x:2x2x1
jax: 0.10.0
libtpu: 0.0.40
codegen_flags: <defaults>
</compile_context>

<pallas_src>
import functools

import numpy as np
import jax
import jax.numpy as jnp
from jax.experimental import pallas as pl
from jax.experimental.pallas import tpu as pltpu

_LANE = 128
_TARGET_TILE_BYTES = 4 * 1024 * 1024   # per-buffer tile (~HBM roofline knee)
_MIN_COPY_BYTES = 4 * 1024 * 1024      # below this, a device copy is pure overhead
_VMEM_LIMIT_BYTES = 24 * 1024 * 1024   # 4 live buffers x 4 MiB + headroom


def _copy_kernel(x_ref, o_ref):
    # Straight VMEM copy of the current (tile_rows, cols) lane-dense tile.
    o_ref[...] = x_ref[...]


def _sublane_granule(itemsize):
    """Packed-sublane granularity: 8 (32-bit), 16 (16-bit), 32 (8-bit)."""
    return 8 * max(1, 4 // itemsize)


def _lane_dense_2d(total, granule):
    """Pick (rows, cols): rows*cols == total, cols a multiple of 128, rows >= granule."""
    if total <= 0 or total % _LANE != 0:
        return None
    cols = _LANE
    # Widen the lane dim (fewer, larger DMA descriptors / fewer grid steps)
    # while it still divides the element count and rows stays >= one full tile.
    while total % (cols * 2) == 0 and (total // (cols * 2)) >= granule:
        cols *= 2
    return total // cols, cols


@functools.partial(jax.jit, static_argnames=("rows", "cols", "tile_rows"))
def _materialized_copy(x, *, rows, cols, tile_rows):
    # Reshapes are free bitcasts here (same jit as the pallas_call).
    x_flat = x.reshape(rows, cols)
    grid_rows = pl.cdiv(rows, tile_rows)
    out_flat = pl.pallas_call(
        _copy_kernel,
        out_shape=jax.ShapeDtypeStruct((rows, cols), x.dtype),
        grid_spec=pltpu.PrefetchScalarGridSpec(
            num_scalar_prefetch=0,
            grid=(grid_rows,),
            in_specs=[pl.BlockSpec((tile_rows, cols), lambda i: (i, 0))],
            out_specs=pl.BlockSpec((tile_rows, cols), lambda i: (i, 0)),
        ),
        # No input_output_aliases: a materialized copy means a fresh output
        # buffer; the caller's x stays valid (PyTorch semantics).
        compiler_params=pltpu.CompilerParams(
            dimension_semantics=("parallel",),   # lets v7x shard blocks across 2 TCs
            vmem_limit_bytes=_VMEM_LIMIT_BYTES,
        ),
    )(x_flat)
    return out_flat.reshape(x.shape)


def shape_printer(x, text="", *, materialize_copy=False,
                  min_copy_bytes=_MIN_COPY_BYTES):
    """Pallas equivalent of ShapePrinter.forward: print shape, return x."""
    # Host-side static shape print (same observable behavior as
    # `print(self.text, x.size())`).
    # TODO(synk): under jax.jit this fires at trace time only; true per-call
    # printing would need jax.debug.print / io_callback (adds real device cost).
    print(text, tuple(x.shape))

    if not materialize_copy:
        # Pure identity: the fastest correct implementation on every generation.
        return x

    itemsize = jnp.dtype(x.dtype).itemsize
    total_bytes = x.size * itemsize
    granule = _sublane_granule(itemsize)
    dims = _lane_dense_2d(x.size, granule)

    # Size gate + lane-density gate: small tensors are dominated by launch /
    # per-grid-step overhead, and non-128-multiple element counts would need
    # padding. Returning x is exact either way.
    if dims is None or total_bytes < min_copy_bytes:
        return x

    rows, cols = dims

    # Row tile: largest tile keeping one buffer <= ~4 MiB, rounded down to the
    # dtype's packed-sublane granularity (unmasked full-vreg stores).
    tile_rows = max(granule,
                    (_TARGET_TILE_BYTES // (cols * itemsize)) // granule * granule)
    if rows >= 2 * granule:
        # Guarantee >= 2 grid blocks so both v7x TensorCores get work on the
        # "parallel" axis; neutral on single-TC v5e/v6e.
        tile_rows = min(tile_rows, max(granule, (rows // 2) // granule * granule))
    else:
        tile_rows = rows  # full-extent block along the sublane axis (always legal)
    tile_rows = min(tile_rows, rows)

    return _materialized_copy(x, rows=rows, cols=cols, tile_rows=tile_rows)


if __name__ == "__main__":
    key = jax.random.PRNGKey(0)
    # Small NCHW input consistent with the module's typical use in a conv net.
    x = jax.random.normal(key, (2, 4, 16, 16), dtype=jnp.float32)
    expected = np.asarray(x)

    # Production path: identity pass-through, no device work.
    y = shape_printer(x, text="ShapePrinter:")
    y = jax.block_until_ready(y)
    assert y.shape == x.shape and y.dtype == x.dtype
    assert np.array_equal(np.asarray(y), expected)

    # Exercise the Pallas copy kernel once (size gate bypassed so this small
    # demo tensor actually goes through pallas_call) and validate it.
    y_copy = shape_printer(x, text="ShapePrinter (materialized):",
                           materialize_copy=True, min_copy_bytes=0)
    y_copy = jax.block_until_ready(y_copy)
    assert y_copy.shape == x.shape and y_copy.dtype == x.dtype
    assert np.array_equal(np.asarray(y_copy), expected)

    print("KERNEL_OK")
</pallas_src>

<mosaic_0001>
module attributes {stable_mosaic.version = 11 : i64} {
  func.func @_copy_kernel(%arg0: i32, %arg1: memref<8x256xf32, #tpu.memory_space<vmem>>, %arg2: memref<8x256xf32, #tpu.memory_space<vmem>>) attributes {dimension_semantics = [#tpu.dimension_semantics<parallel>], iteration_bounds = array<i64: 1>, scalar_prefetch = 0 : i64, scratch_operands = 0 : i64, tpu.core_type = #tpu.core_type<tc>, window_params = [{transform_indices = @transform_0, window_bounds = array<i64: 8, 256>}, {transform_indices = @transform_1, window_bounds = array<i64: 8, 256>}]} {
    %c0 = arith.constant 0 : index
    %c0_0 = arith.constant 0 : index
    %0 = vector.load %arg1[%c0, %c0_0] : memref<8x256xf32, #tpu.memory_space<vmem>>, vector<8x256xf32>
    %c0_1 = arith.constant 0 : index
    %c0_2 = arith.constant 0 : index
    %1 = vector.load %arg2[%c0_1, %c0_2] : memref<8x256xf32, #tpu.memory_space<vmem>>, vector<8x256xf32>
    tpu.vector_store %arg2[%c0_1, %c0_2], %0 {strides = array<i32>} : memref<8x256xf32, #tpu.memory_space<vmem>>, vector<8x256xf32>,
    return
  }
  func.func @transform_0(%arg0: i32) -> (i32, i32) {
    %c0_i32 = arith.constant 0 : i32
    %c0_i32_0 = arith.constant 0 : i32
    return %arg0, %c0_i32 : i32, i32
  }
  func.func @transform_1(%arg0: i32) -> (i32, i32) {
    %c0_i32 = arith.constant 0 : i32
    %c0_i32_0 = arith.constant 0 : i32
    return %arg0, %c0_i32 : i32, i32
  }
}

</mosaic_0001>

<llo_original>
// kernel: _materialized_copy.1
$region0: #{_materialized_copy.1}
  #allocation0 [shape = 'u32[]', space=smem, size = 0x4, offset = 0x4, fixed_abs, tag = 'smem constant byte address 0x4 - core index']
  #allocation1 [shape = 'u32[144,128]{1,0:T(1,128)}', space=vmem, size = 0x12000, scoped, tag = 'internal scratch']
  %s0 = inlined_call_operand.vmem [shape: f32[8,256], index: 0, kind: input, shape index: {}]
  %s1 = inlined_call_operand.vmem [shape: f32[8,256], index: 1, kind: output, shape index: {}]
  %s2 = sld [smem:[#allocation0]]
  $region14: #{_materialized_copy.1} parent=0
    _
  %s4 = ssub.s32 1, %s2
  %s5 = scalar_select 0, %s4, %s2
  // Predicated region
  $region2: #{_materialized_copy.1} parent=0 // pred_check
    _
  $region3: #{_materialized_copy.1} parent=0 // pred_check_branch
    %7 = sbr.rel (0) target = $region5
  $region4: #{_materialized_copy.1} parent=0 // pred_region
    _
  $region5: #{_materialized_copy.1} parent=0 // pred_fallthru
    _
  %v8 = vld [vmem:[%s0] sm:$0xff]
  %v9 = vld [vmem:[%s0 + $0x8] sm:$0xff]
  %10 = vst [vmem:[%s1] sm:$0xff] %v8
  %11 = vst [vmem:[%s1 + $0x8] sm:$0xff] %v9
  // Predicated region
  $region6: #{_materialized_copy.1} parent=0 // pred_check
    _
  $region7: #{_materialized_copy.1} parent=0 // pred_check_branch
    %13 = sbr.rel (0) target = $region9
  $region8: #{_materialized_copy.1} parent=0 // pred_region
    _
  $region9: #{_materialized_copy.1} parent=0 // pred_fallthru
    _
  // Predicated region
  $region10: #{_materialized_copy.1} parent=0 // pred_check
    _
  $region11: #{_materialized_copy.1} parent=0 // pred_check_branch
    %15 = sbr.rel (0) target = $region13
  $region12: #{_materialized_copy.1} parent=0 // pred_region
    _
  $region13: #{_materialized_copy.1} parent=0 // pred_fallthru
    _

</llo_original>
